<compile_context>
chip_gen: v6e
topology: v6e:2x2x1
jax: 0.10.0
libtpu: 0.0.40
codegen_flags: <defaults>
</compile_context>

<pallas_src>
import functools

import jax
import jax.numpy as jnp
from jax import lax
from jax.experimental import pallas as pl
from jax.experimental.pallas import tpu as pltpu

_VMEM_LIMIT = 32 * 1024 * 1024  # safe on v5e/v6e/v7x; raise on 128-MiB parts.


# ---------------------------------------------------------------------------
# Tile-size helpers
# ---------------------------------------------------------------------------
def _pick_block_m(M, target=1024):
    """Largest divisor of M that is a multiple of 8, <= target, and leaves
    >= 2 grid steps when possible (megacore sharding)."""
    cap = min(target, M)
    if M >= 16:
        cap = min(cap, max(8, M // 2))
    for bm in range(cap, 7, -1):
        if M % bm == 0 and bm % 8 == 0:
            return bm
    return M  # fall back to a single full block


def _pick_block_h(H, W, target_rows=1024):
    """Divisor of H such that block_h * W ~= target_rows output pixels."""
    tgt = max(1, target_rows // max(W, 1))
    best = 1
    for bh in range(1, H + 1):
        if H % bh == 0 and bh <= tgt:
            best = bh
    return best


# ---------------------------------------------------------------------------
# Kernel A: fused 1x1 conv  ->  Y = relu(X @ W_scaled + bias)   (bf16 out)
# ---------------------------------------------------------------------------
def _matmul_bias_relu_kernel(x_ref, w_ref, b_ref, o_ref):
    acc = jnp.dot(x_ref[...], w_ref[...], preferred_element_type=jnp.float32)
    out = jnp.maximum(acc + b_ref[...], 0.0)
    o_ref[...] = out.astype(o_ref.dtype)


def matmul_bias_relu(x2d, w2d, bias, *, out_dtype=jnp.bfloat16, block_m=1024):
    """x2d: [M, K] bf16, w2d: [K, Cout] bf16 (BN scale folded), bias: [1, Cout] f32."""
    M, K = x2d.shape
    K2, Cout = w2d.shape
    assert K == K2
    bm = _pick_block_m(M, block_m)

    flops = 2 * M * K * Cout
    bytes_accessed = 2 * (M * K + K * Cout + M * Cout) + 4 * Cout

    return pl.pallas_call(
        _matmul_bias_relu_kernel,
        out_shape=jax.ShapeDtypeStruct((M, Cout), out_dtype),
        grid_spec=pltpu.PrefetchScalarGridSpec(
            num_scalar_prefetch=0,
            grid=(M // bm,),
            in_specs=[
                pl.BlockSpec((bm, K), lambda i: (i, 0)),     # X tile
                pl.BlockSpec((K, Cout), lambda i: (0, 0)),   # full scaled weight
                pl.BlockSpec((1, Cout), lambda i: (0, 0)),   # folded BN bias
            ],
            out_specs=pl.BlockSpec((bm, Cout), lambda i: (i, 0)),
        ),
        compiler_params=pltpu.CompilerParams(
            dimension_semantics=("parallel",),
            vmem_limit_bytes=_VMEM_LIMIT),
        cost_estimate=pl.CostEstimate(
            flops=int(flops), transcendentals=0,
            bytes_accessed=int(bytes_accessed)),
    )(x2d, w2d, bias)


# ---------------------------------------------------------------------------
# Kernel B: fused  3x3 conv + bn2 + relu  ->  1x1 conv + bn3 + residual + relu
# The padded conv2 input window is assembled in VMEM from a main block plus
# two 1-row halo BlockSpecs on the same padded array (no HBM im2col).
# ---------------------------------------------------------------------------
def _conv3x3_tail_kernel(xm_ref, xh1_ref, xh2_ref, w2_ref, b2_ref,
                         w3_ref, b3_ref, res_ref, o_ref, *, bh, w_out):
    # Assemble (bh + 2) padded rows in VMEM: main block + 2 halo rows.
    rows = jnp.concatenate([xm_ref[0], xh1_ref[0], xh2_ref[0]], axis=0)
    cp = rows.shape[-1]
    planes = w2_ref.shape[-1]
    cout = w3_ref.shape[-1]

    # --- conv2 (3x3, pad already applied) + bn2 (scale folded) + relu -----
    acc = jnp.zeros((bh * w_out, planes), jnp.float32)
    for kh in range(3):
        for kw in range(3):
            patch = rows[kh:kh + bh, kw:kw + w_out, :].reshape(bh * w_out, cp)
            acc = acc + jnp.dot(patch, w2_ref[kh * 3 + kw],
                                preferred_element_type=jnp.float32)
    y2 = jnp.maximum(acc + b2_ref[...], 0.0).astype(jnp.bfloat16)

    # --- conv3 (1x1) + bn3 + residual add + relu ---------------------------
    acc3 = jnp.dot(y2, w3_ref[...], preferred_element_type=jnp.float32)
    res = res_ref[0].reshape(bh * w_out, cout).astype(jnp.float32)
    out = jnp.maximum(acc3 + b3_ref[...] + res, 0.0)
    o_ref[0] = out.reshape(bh, w_out, cout).astype(o_ref.dtype)


def conv3x3_bottleneck_tail(y1p, w2s, b2, w3s, b3, residual_nhwc):
    """y1p: [N, H+2, W+2, planes] bf16 (zero-padded conv1 output)
       w2s: [9, planes, planes] bf16 (BN2 scale folded)
       w3s: [planes, 4*planes] bf16 (BN3 scale folded)
       b2/b3: [1, C] f32, residual_nhwc: [N, H, W, 4*planes] bf16."""
    N, Hp, Wp, Cp = y1p.shape
    H, W = Hp - 2, Wp - 2
    planes = w2s.shape[-1]
    Cout = w3s.shape[-1]
    assert residual_nhwc.shape == (N, H, W, Cout)

    bh = _pick_block_h(H, W)
    grid = (N, H // bh)

    kernel = functools.partial(_conv3x3_tail_kernel, bh=bh, w_out=W)

    flops = 2 * N * H * W * (9 * Cp * planes + planes * Cout)
    bytes_accessed = (2 * (N * Hp * Wp * Cp + 9 * Cp * planes + planes * Cout
                           + N * H * W * Cout)       # bf16 inputs
                      + 4 * (N * H * W * Cout)       # f32 output
                      + 4 * (planes + Cout))         # biases

    return pl.pallas_call(
        kernel,
        out_shape=jax.ShapeDtypeStruct((N, H, W, Cout), jnp.float32),
        grid_spec=pltpu.PrefetchScalarGridSpec(
            num_scalar_prefetch=0,
            grid=grid,
            in_specs=[
                # main block of padded conv1 output: rows [hb*bh, hb*bh+bh)
                pl.BlockSpec((1, bh, Wp, Cp), lambda n, hb: (n, hb, 0, 0)),
                # halo row hb*bh + bh   (block size 1 -> element index)
                pl.BlockSpec((1, 1, Wp, Cp),
                             lambda n, hb: (n, (hb + 1) * bh, 0, 0)),
                # halo row hb*bh + bh + 1
                pl.BlockSpec((1, 1, Wp, Cp),
                             lambda n, hb: (n, (hb + 1) * bh + 1, 0, 0)),
                pl.BlockSpec((9, Cp, planes), lambda n, hb: (0, 0, 0)),   # W2
                pl.BlockSpec((1, planes), lambda n, hb: (0, 0)),          # b2
                pl.BlockSpec((Cp, Cout), lambda n, hb: (0, 0)),           # W3
                pl.BlockSpec((1, Cout), lambda n, hb: (0, 0)),            # b3
                pl.BlockSpec((1, bh, W, Cout), lambda n, hb: (n, hb, 0, 0)),
            ],
            out_specs=pl.BlockSpec((1, bh, W, Cout), lambda n, hb: (n, hb, 0, 0)),
        ),
        compiler_params=pltpu.CompilerParams(
            dimension_semantics=("parallel", "parallel"),
            vmem_limit_bytes=_VMEM_LIMIT),
        cost_estimate=pl.CostEstimate(
            flops=int(flops), transcendentals=0,
            bytes_accessed=int(bytes_accessed)),
    )(y1p, y1p, y1p, w2s, b2, w3s, b3, residual_nhwc)


# ---------------------------------------------------------------------------
# Plain-JAX glue: BN folding into weights, layout conversions
# ---------------------------------------------------------------------------
def _bn_fold(gamma, beta, mean, var, eps=1e-5):
    scale = gamma / jnp.sqrt(var + eps)                      # [Cout]
    bias = (beta - mean * scale).reshape(1, -1).astype(jnp.float32)
    return scale.astype(jnp.float32), bias


def bottleneck_forward(x_nchw, params, stride=1, eps=1e-5):
    """Forward of the Bottleneck block (stride=1, downsample=None). NCHW in/out."""
    assert stride == 1, "TODO(synk): stride > 1 / downsample not implemented"
    x = jnp.transpose(x_nchw, (0, 2, 3, 1))                  # NHWC f32
    N, H, W, Cin = x.shape
    x_bf16 = x.astype(jnp.bfloat16)

    # --- stage 1: conv1 (1x1) + bn1 + relu --------------------------------
    w1 = params['conv1_w'][:, :, 0, 0]                       # [planes, Cin]
    planes = w1.shape[0]
    s1, b1 = _bn_fold(params['bn1_gamma'], params['bn1_beta'],
                      params['bn1_mean'], params['bn1_var'], eps)
    w1s = (jnp.transpose(w1, (1, 0)) * s1[None, :]).astype(jnp.bfloat16)
    y1 = matmul_bias_relu(x_bf16.reshape(N * H * W, Cin), w1s, b1)
    y1 = y1.reshape(N, H, W, planes)
    y1p = jnp.pad(y1, ((0, 0), (1, 1), (1, 1), (0, 0)))      # bf16, conv2 padding

    # --- stages 2 + 3 fused: conv2+bn2+relu -> conv3+bn3+residual+relu -----
    s2, b2 = _bn_fold(params['bn2_gamma'], params['bn2_beta'],
                      params['bn2_mean'], params['bn2_var'], eps)
    w2 = jnp.transpose(params['conv2_w'], (2, 3, 1, 0))      # [3,3,Cin2,planes]
    w2s = (w2 * s2[None, None, None, :]).reshape(9, planes, planes)
    w2s = w2s.astype(jnp.bfloat16)

    w3 = params['conv3_w'][:, :, 0, 0]                       # [4p, planes]
    cout = w3.shape[0]
    assert cout == Cin, "residual add requires inplanes == planes * 4"
    s3, b3 = _bn_fold(params['bn3_gamma'], params['bn3_beta'],
                      params['bn3_mean'], params['bn3_var'], eps)
    w3s = (jnp.transpose(w3, (1, 0)) * s3[None, :]).astype(jnp.bfloat16)

    out = conv3x3_bottleneck_tail(y1p, w2s, b2, w3s, b3, x_bf16)
    return jnp.transpose(out, (0, 3, 1, 2))                  # back to NCHW


# ---------------------------------------------------------------------------
# Pure-JAX float32 reference (for correctness check)
# ---------------------------------------------------------------------------
def _ref_conv(x_nhwc, w_oihw, stride=1, pad=0):
    w_hwio = jnp.transpose(w_oihw, (2, 3, 1, 0))
    return lax.conv_general_dilated(
        x_nhwc, w_hwio, window_strides=(stride, stride),
        padding=[(pad, pad), (pad, pad)],
        dimension_numbers=('NHWC', 'HWIO', 'NHWC'))


def reference_forward(x_nchw, params, stride=1, eps=1e-5):
    x = jnp.transpose(x_nchw, (0, 2, 3, 1))

    def bn(y, g, b, m, v):
        return (y - m) / jnp.sqrt(v + eps) * g + b

    out = _ref_conv(x, params['conv1_w'], 1, 0)
    out = jax.nn.relu(bn(out, params['bn1_gamma'], params['bn1_beta'],
                         params['bn1_mean'], params['bn1_var']))
    out = _ref_conv(out, params['conv2_w'], stride, 1)
    out = jax.nn.relu(bn(out, params['bn2_gamma'], params['bn2_beta'],
                         params['bn2_mean'], params['bn2_var']))
    out = _ref_conv(out, params['conv3_w'], 1, 0)
    out = bn(out, params['bn3_gamma'], params['bn3_beta'],
             params['bn3_mean'], params['bn3_var'])
    out = jax.nn.relu(out + x)
    return jnp.transpose(out, (0, 3, 1, 2))


# ---------------------------------------------------------------------------
if __name__ == "__main__":
    key = jax.random.PRNGKey(0)
    N, planes, H, W = 2, 8, 16, 16
    inplanes = planes * 4          # residual add works (downsample=None)
    stride = 1

    ks = jax.random.split(key, 16)
    params = {
        'conv1_w': 0.1 * jax.random.normal(ks[0], (planes, inplanes, 1, 1), jnp.float32),
        'conv2_w': 0.1 * jax.random.normal(ks[1], (planes, planes, 3, 3), jnp.float32),
        'conv3_w': 0.1 * jax.random.normal(ks[2], (planes * 4, planes, 1, 1), jnp.float32),
        'bn1_gamma': 1.0 + 0.1 * jax.random.normal(ks[3], (planes,), jnp.float32),
        'bn1_beta': 0.1 * jax.random.normal(ks[4], (planes,), jnp.float32),
        'bn1_mean': 0.1 * jax.random.normal(ks[5], (planes,), jnp.float32),
        'bn1_var': jax.random.uniform(ks[6], (planes,), jnp.float32, 0.5, 1.5),
        'bn2_gamma': 1.0 + 0.1 * jax.random.normal(ks[7], (planes,), jnp.float32),
        'bn2_beta': 0.1 * jax.random.normal(ks[8], (planes,), jnp.float32),
        'bn2_mean': 0.1 * jax.random.normal(ks[9], (planes,), jnp.float32),
        'bn2_var': jax.random.uniform(ks[10], (planes,), jnp.float32, 0.5, 1.5),
        'bn3_gamma': 1.0 + 0.1 * jax.random.normal(ks[11], (planes * 4,), jnp.float32),
        'bn3_beta': 0.1 * jax.random.normal(ks[12], (planes * 4,), jnp.float32),
        'bn3_mean': 0.1 * jax.random.normal(ks[13], (planes * 4,), jnp.float32),
        'bn3_var': jax.random.uniform(ks[14], (planes * 4,), jnp.float32, 0.5, 1.5),
    }
    x = jax.random.normal(ks[15], (N, inplanes, H, W), jnp.float32)

    out = jax.block_until_ready(bottleneck_forward(x, params, stride=stride))
    ref = jax.block_until_ready(reference_forward(x, params, stride=stride))

    assert out.shape == (N, planes * 4, H, W), out.shape
    # bf16 MXU inputs (activations/weights/residual) -> tolerance sized for
    # bf16 rounding error against the float32 reference.
    max_err = float(jnp.max(jnp.abs(out - ref)))
    assert max_err < 5e-2, f"max abs err {max_err}"
    print("KERNEL_OK")
</pallas_src>

<mosaic_0001>
module attributes {stable_mosaic.version = 11 : i64} {
  func.func @_matmul_bias_relu_kernel(%arg0: i32, %arg1: memref<256x32xbf16, #tpu.memory_space<vmem>>, %arg2: memref<32x8xbf16, #tpu.memory_space<vmem>>, %arg3: memref<1x8xf32, #tpu.memory_space<vmem>>, %arg4: memref<256x8xbf16, #tpu.memory_space<vmem>>) attributes {dimension_semantics = [#tpu.dimension_semantics<parallel>], iteration_bounds = array<i64: 2>, scalar_prefetch = 0 : i64, scratch_operands = 0 : i64, tpu.core_type = #tpu.core_type<tc>, window_params = [{transform_indices = @transform_0, window_bounds = array<i64: 256, 32>}, {pipeline_mode = #tpu.pipeline_mode<synchronous>, transform_indices = @transform_1, window_bounds = array<i64: 32, 8>}, {pipeline_mode = #tpu.pipeline_mode<synchronous>, transform_indices = @transform_2, window_bounds = array<i64: 1, 8>}, {transform_indices = @transform_3, window_bounds = array<i64: 256, 8>}]} {
    %c0 = arith.constant 0 : index
    %c0_0 = arith.constant 0 : index
    %0 = vector.load %arg1[%c0, %c0_0] : memref<256x32xbf16, #tpu.memory_space<vmem>>, vector<256x32xbf16>
    %c0_1 = arith.constant 0 : index
    %c0_2 = arith.constant 0 : index
    %1 = vector.load %arg2[%c0_1, %c0_2] : memref<32x8xbf16, #tpu.memory_space<vmem>>, vector<32x8xbf16>
    %cst = arith.constant dense<0.000000e+00> : vector<256x8xf32>
    %2 = tpu.matmul %0, %1, %cst {dimension_numbers = #tpu.dot_dimension_numbers<[1], [0], [0], [1], [0, 0, 1, 1], [], []>} : vector<256x32xbf16>, vector<32x8xbf16>, vector<256x8xf32> -> vector<256x8xf32>
    %c0_3 = arith.constant 0 : index
    %c0_4 = arith.constant 0 : index
    %3 = vector.load %arg3[%c0_3, %c0_4] : memref<1x8xf32, #tpu.memory_space<vmem>>, vector<1x8xf32>
    %4 = vector.broadcast %3 : vector<1x8xf32> to vector<256x8xf32>
    %5 = arith.addf %2, %4 : vector<256x8xf32>
    %cst_5 = arith.constant 0.000000e+00 : f32
    %6 = vector.broadcast %cst_5 : f32 to vector<256x8xf32>
    %7 = arith.maximumf %5, %6 : vector<256x8xf32>
    %8 = arith.truncf %7 : vector<256x8xf32> to vector<256x8xbf16>
    %c0_6 = arith.constant 0 : index
    %c0_7 = arith.constant 0 : index
    %9 = vector.load %arg4[%c0_6, %c0_7] : memref<256x8xbf16, #tpu.memory_space<vmem>>, vector<256x8xbf16>
    tpu.vector_store %arg4[%c0_6, %c0_7], %8 {strides = array<i32>} : memref<256x8xbf16, #tpu.memory_space<vmem>>, vector<256x8xbf16>,
    return
  }
  func.func @transform_0(%arg0: i32) -> (i32, i32) {
    %c0_i32 = arith.constant 0 : i32
    %c0_i32_0 = arith.constant 0 : i32
    return %arg0, %c0_i32 : i32, i32
  }
  func.func @transform_1(%arg0: i32) -> (i32, i32) {
    %c0_i32 = arith.constant 0 : i32
    %c0_i32_0 = arith.constant 0 : i32
    %c0_i32_1 = arith.constant 0 : i32
    return %c0_i32, %c0_i32_0 : i32, i32
  }
  func.func @transform_2(%arg0: i32) -> (i32, i32) {
    %c0_i32 = arith.constant 0 : i32
    %c0_i32_0 = arith.constant 0 : i32
    %c0_i32_1 = arith.constant 0 : i32
    return %c0_i32, %c0_i32_0 : i32, i32
  }
  func.func @transform_3(%arg0: i32) -> (i32, i32) {
    %c0_i32 = arith.constant 0 : i32
    %c0_i32_0 = arith.constant 0 : i32
    return %arg0, %c0_i32 : i32, i32
  }
}

</mosaic_0001>

<llo_original>
// kernel: tpu_custom_call.1
$region0: #{tpu_custom_call.1}
  #allocation0 [shape = 'u32[]', space=smem, size = 0x4, offset = 0x4, fixed_abs, tag = 'smem constant byte address 0x4 - core index']
  #allocation1 [shape = 'u32[144,128]{1,0:T(1,128)}', space=vmem, size = 0x12000, scoped, tag = 'internal scratch']
  %s0 = inlined_call_operand.vmem [shape: bf16[512,32], index: 0, kind: input, shape index: {}]
  %s1 = inlined_call_operand.vmem [shape: bf16[32,8], index: 1, kind: input, shape index: {}]
  %s2 = inlined_call_operand.vmem [shape: f32[1,8], index: 2, kind: input, shape index: {}]
  %s3 = inlined_call_operand.vmem [shape: bf16[512,8], index: 3, kind: output, shape index: {}]
  %s4 = sld [smem:[#allocation0]]
  $region45: #{tpu_custom_call.1} parent=0
    _
  %s6 = ssub.s32 1, %s4
  %s7 = scalar_select 0, %s6, %s4
  loop: start=0, step=1, limit=4
  $region2: #{tpu_custom_call.1} parent=0 // loop_pre_header
    _
  $region3: #{tpu_custom_call.1} parent=0 // loop_header
    %s9 = sphi 0, %s13
    %p10 = scmp.ge.s32.totalorder %s9, 4
    %s19 = sphi 0, %s21
    %s22 = sphi 0, %s19
    %s23 = sphi 0, %s22
    %s39 = sphi 0, %s23
    %s43 = sphi 0, %s43
    %s45 = sphi 0, %s43
    %s46 = sphi 0, %s45
    %s60 = sphi 0, %s46
    %s64 = sphi 0, %s64
    %s66 = sphi 0, %s64
    %s67 = sphi 0, %s66
    %s81 = sphi 0, %s67
    %s87 = sphi 0, %s89
    %s90 = sphi 0, %s87
    %s91 = sphi 0, %s90
    %s107 = sphi 0, %s91
  $region4: #{tpu_custom_call.1} parent=0 // loop_header_branch
    %12 = sbr.rel (%p10) target = $region8
  $region5: #{tpu_custom_call.1} parent=0 // loop_body
    %s14 = ssub.s32 %s9, 1
    %s15 = ssub.s32 %s9, 2
    %s16 = sadd.s32 %s9, 1
    %s17 = ssub.s32 %s9, %s16
    %p18 = scmp.eq.s32.totalorder %s17, 0
    %s20 = sadd.s32 %s19, 1
    %s21 = scalar_select %p18, %s19, %s20
    %p24 = pneg %p18
    %p25 = scmp.eq.s32.totalorder %s9, 1
    %p26 = por %p24, %p25
    %p27 = scmp.ne.s32.totalorder %s19, %s22
    %p28 = scmp.eq.s32.totalorder %s9, 0
    %p29 = por %p27, %p28
    %p30 = scmp.ne.s32.totalorder %s19, %s22
    %p31 = scmp.eq.s32.totalorder %s14, 1
    %p32 = por %p30, %p31
    %p33 = scmp.ne.s32.totalorder %s22, %s23
    %p34 = scmp.eq.s32.totalorder %s14, 0
    %p35 = por %p33, %p34
    %p36 = scmp.ne.s32.totalorder %s22, %s23
    %p37 = scmp.eq.s32.totalorder %s15, 1
    %p38 = por %p36, %p37
    %p40 = scmp.ne.s32.totalorder %s23, %s39
    %p41 = scmp.eq.s32.totalorder %s15, 0
    %p42 = por %p40, %p41
    %s44 = sadd.s32 %s43, 1
    %p47 = scmp.eq.s32.totalorder %s9, 1
    %p48 = scmp.ne.s32.totalorder %s43, %s45
    %p49 = scmp.eq.s32.totalorder %s9, 0
    %p50 = por %p48, %p49
    %p51 = scmp.ne.s32.totalorder %s43, %s45
    %p52 = scmp.eq.s32.totalorder %s14, 1
    %p53 = por %p51, %p52
    %p54 = scmp.ne.s32.totalorder %s45, %s46
    %p55 = scmp.eq.s32.totalorder %s14, 0
    %p56 = por %p54, %p55
    %p57 = scmp.ne.s32.totalorder %s45, %s46
    %p58 = scmp.eq.s32.totalorder %s15, 1
    %p59 = por %p57, %p58
    %p61 = scmp.ne.s32.totalorder %s46, %s60
    %p62 = scmp.eq.s32.totalorder %s15, 0
    %p63 = por %p61, %p62
    %s65 = sadd.s32 %s64, 1
    %p68 = scmp.eq.s32.totalorder %s9, 1
    %p69 = scmp.ne.s32.totalorder %s64, %s66
    %p70 = scmp.eq.s32.totalorder %s9, 0
    %p71 = por %p69, %p70
    %p72 = scmp.ne.s32.totalorder %s64, %s66
    %p73 = scmp.eq.s32.totalorder %s14, 1
    %p74 = por %p72, %p73
    %p75 = scmp.ne.s32.totalorder %s66, %s67
    %p76 = scmp.eq.s32.totalorder %s14, 0
    %p77 = por %p75, %p76
    %p78 = scmp.ne.s32.totalorder %s66, %s67
    %p79 = scmp.eq.s32.totalorder %s15, 1
    %p80 = por %p78, %p79
    %p82 = scmp.ne.s32.totalorder %s67, %s81
    %p83 = scmp.eq.s32.totalorder %s15, 0
    %p84 = por %p82, %p83
    %s85 = ssub.s32 %s9, %s16
    %p86 = scmp.eq.s32.totalorder %s85, 0
    %s88 = sadd.s32 %s87, 1
    %s89 = scalar_select %p86, %s87, %s88
    %p92 = pneg %p86
    %p93 = scmp.eq.s32.totalorder %s9, 1
    %p94 = por %p92, %p93
    %p95 = scmp.ne.s32.totalorder %s87, %s90
    %p96 = scmp.eq.s32.totalorder %s9, 0
    %p97 = por %p95, %p96
    %p98 = scmp.ne.s32.totalorder %s87, %s90
    %p99 = scmp.eq.s32.totalorder %s14, 1
    %p100 = por %p98, %p99
    %p101 = scmp.ne.s32.totalorder %s90, %s91
    %p102 = scmp.eq.s32.totalorder %s14, 0
    %p103 = por %p101, %p102
    %p104 = scmp.ne.s32.totalorder %s90, %s91
    %p105 = scmp.eq.s32.totalorder %s15, 1
    %p106 = por %p104, %p105
    %p108 = scmp.ne.s32.totalorder %s91, %s107
    %p109 = scmp.eq.s32.totalorder %s15, 0
    %p110 = por %p108, %p109
    %p111 = scmp.le.s32.totalorder 1, %s9
    %p112 = scmp.lt.s32.totalorder %s9, 3
    %p113 = pnand %p111, %p112
    %p114 = pneg %p113
    // Predicated region
    $region9: #{tpu_custom_call.1} parent=5 // pred_check
      _
    $region10: #{tpu_custom_call.1} parent=5 // pred_check_branch
      %116 = sbr.rel (%p113) target = $region12
    $region11: #{tpu_custom_call.1} parent=5 // pred_region
      %s117 = ssub.s32 %s9, 1
      // Predicated region
      $region13: #{tpu_custom_call.1} parent=11 // pred_check
        %p118 = pneg %p56
      $region14: #{tpu_custom_call.1} parent=11 // pred_check_branch
        %120 = sbr.rel (%p118) target = $region16
      $region15: #{tpu_custom_call.1} parent=11 // pred_region
        _
      $region16: #{tpu_custom_call.1} parent=11 // pred_fallthru
        _
      // Predicated region
      $region17: #{tpu_custom_call.1} parent=11 // pred_check
        %p121 = pneg %p77
      $region18: #{tpu_custom_call.1} parent=11 // pred_check_branch
        %123 = sbr.rel (%p121) target = $region20
      $region19: #{tpu_custom_call.1} parent=11 // pred_region
        _
      $region20: #{tpu_custom_call.1} parent=11 // pred_fallthru
        _
    $region12: #{tpu_custom_call.1} parent=5 // pred_fallthru
      _
    %p124 = scmp.lt.s32.totalorder %s9, 2
    // Predicated region
    $region21: #{tpu_custom_call.1} parent=5 // pred_check
      %p125 = pneg %p124
    $region22: #{tpu_custom_call.1} parent=5 // pred_check_branch
      %127 = sbr.rel (%p125) target = $region24
    $region23: #{tpu_custom_call.1} parent=5 // pred_region
      // Predicated region
      $region25: #{tpu_custom_call.1} parent=23 // pred_check
        %p128 = pneg %p29
      $region26: #{tpu_custom_call.1} parent=23 // pred_check_branch
        %130 = sbr.rel (%p128) target = $region28
      $region27: #{tpu_custom_call.1} parent=23 // pred_region
        %s131 = smul.u32 32, %s9
        %p132 = scmp.lt.s32.totalorder %s131, 63
        %s133 = scalar_select %p132, %s131, 63
        %s134 = smul.addr %s133, 4
        %s135 = scalar_lea.vmem %s0, %s134
        %s136 = smul.u32 32, %s9
      $region28: #{tpu_custom_call.1} parent=23 // pred_fallthru
        _
    $region24: #{tpu_custom_call.1} parent=5 // pred_fallthru
      _
    %p137 = scmp.le.s32.totalorder 1, %s9
    %p138 = scmp.lt.s32.totalorder %s9, 3
    %p139 = pnand %p137, %p138
    %p140 = pneg %p139
    // Predicated region
    $region29: #{tpu_custom_call.1} parent=5 // pred_check
      _
    $region30: #{tpu_custom_call.1} parent=5 // pred_check_branch
      %142 = sbr.rel (%p139) target = $region32
    $region31: #{tpu_custom_call.1} parent=5 // pred_region
      %s143 = ssub.s32 %s9, 1
      %s144 = smul.u32 32, %s14
      %p145 = scmp.lt.s32.totalorder %s144, 63
      %s146 = scalar_select %p145, %s144, 63
      %s147 = smul.addr %s146, 4
      %s148 = scalar_lea.vmem %s0, %s147
      %p149 = pneg %p35
      %p150 = pneg %p32
      %p151 = pneg %p56
      %p152 = pneg %p53
      %p153 = pneg %p77
      %p154 = pneg %p74
      %p155 = pneg %p103
      %p156 = pneg %p100
      %s157 = smul.u32 32, %s14
      %p158 = scmp.lt.s32.totalorder %s157, 63
      %s159 = scalar_select %p158, %s157, 63
      %s160 = smul.addr %s159, 4
      %s161 = scalar_lea.vmem %s3, %s160
      %s162 = smul.u32 32, %s14
      %p163 = scmp.lt.s32.totalorder %s162, 63
      %s164 = scalar_select %p163, %s162, 63
      %s165 = smul.addr %s164, 4
      %s166 = scalar_lea.vmem %s0, %s165
      %s167 = smul.u32 32, %s14
      %s168 = smul.u32 32, %s14
      %p169 = scmp.lt.s32.totalorder %s168, 63
      %s170 = scalar_select %p169, %s168, 63
      %s171 = smul.addr %s170, 4
      %s172 = scalar_lea.vmem %s3, %s171
      %s173 = smul.u32 32, %s14
      %v175 = vld [vmem:[%s166] sm:$0xf]
      %v176 = vld [vmem:[%s166 + $0x4] sm:$0xf]
      %v177 = vld [vmem:[%s166 + $0x8] sm:$0xf]
      %v178 = vld [vmem:[%s166 + $0xc] sm:$0xf]
      %v179 = vld [vmem:[%s166 + $0x10] sm:$0xf]
      %v180 = vld [vmem:[%s166 + $0x14] sm:$0xf]
      %v181 = vld [vmem:[%s166 + $0x18] sm:$0xf]
      %v182 = vld [vmem:[%s166 + $0x1c] sm:$0xf]
      %v183 = vld [vmem:[%s166 + $0x20] sm:$0xf]
      %v184 = vld [vmem:[%s166 + $0x24] sm:$0xf]
      %v185 = vld [vmem:[%s166 + $0x28] sm:$0xf]
      %v186 = vld [vmem:[%s166 + $0x2c] sm:$0xf]
      %v187 = vld [vmem:[%s166 + $0x30] sm:$0xf]
      %v188 = vld [vmem:[%s166 + $0x34] sm:$0xf]
      %v189 = vld [vmem:[%s166 + $0x38] sm:$0xf]
      %v190 = vld [vmem:[%s166 + $0x3c] sm:$0xf]
      %v191 = vld [vmem:[%s166 + $0x40] sm:$0xf]
      %v192 = vld [vmem:[%s166 + $0x44] sm:$0xf]
      %v193 = vld [vmem:[%s166 + $0x48] sm:$0xf]
      %v194 = vld [vmem:[%s166 + $0x4c] sm:$0xf]
      %v195 = vld [vmem:[%s166 + $0x50] sm:$0xf]
      %v196 = vld [vmem:[%s166 + $0x54] sm:$0xf]
      %v197 = vld [vmem:[%s166 + $0x58] sm:$0xf]
      %v198 = vld [vmem:[%s166 + $0x5c] sm:$0xf]
      %v199 = vld [vmem:[%s166 + $0x60] sm:$0xf]
      %v200 = vld [vmem:[%s166 + $0x64] sm:$0xf]
      %v201 = vld [vmem:[%s166 + $0x68] sm:$0xf]
      %v202 = vld [vmem:[%s166 + $0x6c] sm:$0xf]
      %v203 = vld [vmem:[%s166 + $0x70] sm:$0xf]
      %v204 = vld [vmem:[%s166 + $0x74] sm:$0xf]
      %v205 = vld [vmem:[%s166 + $0x78] sm:$0xf]
      %v206 = vld [vmem:[%s166 + $0x7c] sm:$0xf]
      %v207 = vld [vmem:[%s1] sm:$0xf]
      %v208 = vld [vmem:[%s1 + $0x4] sm:$0xf]
      %v209 = vld [vmem:[%s1 + $0x8] sm:$0xf]
      %v210 = vld [vmem:[%s1 + $0xc] sm:$0xf]
      %v211 = vld [vmem:[%s2] sm:$0x1]
      %v213 = vlaneseq
      %v214 = vshrl.u32 %v213, 7
      %v215 = vsub.s32 0, %v214
      %v216 = vrot.slane %v211, %v215
      %v250 = vunpack.c.l.b16 %v175
      %v251 = vunpack.c.l.b16 %v176
      %v252 = vunpack.c.l.b16 %v177
      %v253 = vunpack.c.l.b16 %v178
      %v254 = vunpack.c.l.b16 %v179
      %v255 = vunpack.c.l.b16 %v180
      %v256 = vunpack.c.l.b16 %v181
      %v257 = vunpack.c.l.b16 %v182
      %v258 = vunpack.c.l.b16 %v183
      %v259 = vunpack.c.l.b16 %v184
      %v260 = vunpack.c.l.b16 %v185
      %v261 = vunpack.c.l.b16 %v186
      %v262 = vunpack.c.l.b16 %v187
      %v263 = vunpack.c.l.b16 %v188
      %v264 = vunpack.c.l.b16 %v189
      %v265 = vunpack.c.l.b16 %v190
      %v266 = vunpack.c.l.b16 %v191
      %v267 = vunpack.c.l.b16 %v192
      %v268 = vunpack.c.l.b16 %v193
      %v269 = vunpack.c.l.b16 %v194
      %v270 = vunpack.c.l.b16 %v195
      %v271 = vunpack.c.l.b16 %v196
      %v272 = vunpack.c.l.b16 %v197
      %v273 = vunpack.c.l.b16 %v198
      %v274 = vunpack.c.l.b16 %v199
      %v275 = vunpack.c.l.b16 %v200
      %v276 = vunpack.c.l.b16 %v201
      %v277 = vunpack.c.l.b16 %v202
      %v278 = vunpack.c.l.b16 %v203
      %v279 = vunpack.c.l.b16 %v204
      %v280 = vunpack.c.l.b16 %v205
      %v281 = vunpack.c.l.b16 %v206
      %v282 = vpack.c.b16 %v251, %v250
      %v283 = vpack.c.b16 %v253, %v252
      %v284 = vpack.c.b16 %v255, %v254
      %v285 = vpack.c.b16 %v257, %v256
      %v286 = vpack.c.b16 %v259, %v258
      %v287 = vpack.c.b16 %v261, %v260
      %v288 = vpack.c.b16 %v263, %v262
      %v289 = vpack.c.b16 %v265, %v264
      %v290 = vpack.c.b16 %v267, %v266
      %v291 = vpack.c.b16 %v269, %v268
      %v292 = vpack.c.b16 %v271, %v270
      %v293 = vpack.c.b16 %v273, %v272
      %v294 = vpack.c.b16 %v275, %v274
      %v295 = vpack.c.b16 %v277, %v276
      %v296 = vpack.c.b16 %v279, %v278
      %v297 = vpack.c.b16 %v281, %v280
      %v302 = vunpack.c.l.b16 %v207
      %v303 = vunpack.c.l.b16 %v208
      %v304 = vunpack.c.l.b16 %v209
      %v305 = vunpack.c.l.b16 %v210
      %v306 = vpack.c.b16 %v303, %v302
      %v307 = vpack.c.b16 %v305, %v304
      %vm310 = vcmask 261120
      %v312 = vsel %vm310, %v282, 0
      %v315 = vsel %vm310, %v283, 0
      %v318 = vsel %vm310, %v284, 0
      %v321 = vsel %vm310, %v285, 0
      %v324 = vsel %vm310, %v286, 0
      %v327 = vsel %vm310, %v287, 0
      %v330 = vsel %vm310, %v288, 0
      %v333 = vsel %vm310, %v289, 0
      %v336 = vsel %vm310, %v290, 0
      %v339 = vsel %vm310, %v291, 0
      %v342 = vsel %vm310, %v292, 0
      %v345 = vsel %vm310, %v293, 0
      %v348 = vsel %vm310, %v294, 0
      %v351 = vsel %vm310, %v295, 0
      %v354 = vsel %vm310, %v296, 0
      %v357 = vsel %vm310, %v297, 0
      %359 = vmatprep.subr.bf16.mxu0 0
      %360 = vmatpush1.bf16.msra.mxu0 0
      %361 = vmatprep.subr.bf16.mxu0 0
      %362 = vmatpush1.bf16.msra.mxu0 0
      %363 = vmatprep.subr.bf16.mxu0 0
      %364 = vmatpush1.bf16.msra.mxu0 0
      %365 = vmatprep.subr.bf16.mxu0 0
      %366 = vmatpush1.bf16.msra.mxu0 0
      %367 = vmatprep.subr.bf16.mxu0 0
      %368 = vmatpush1.bf16.msra.mxu0 0
      %369 = vmatprep.subr.bf16.mxu0 0
      %370 = vmatpush1.bf16.msra.mxu0 0
      %371 = vmatprep.subr.bf16.mxu0 0
      %372 = vmatpush1.bf16.msra.mxu0 %v307
      %373 = vmatprep.subr.bf16.mxu0 0
      %374 = vmatpush1.bf16.msra.mxu0 %v306
      %375 = vmatprep.subr.bf16.mxu0 0
      %376 = vmatpush2.bf16.msra.mxu0 0
      %377 = vmatprep.subr.bf16.mxu0 0
      %378 = vmatpush2.bf16.msra.mxu0 0
      %379 = vmatprep.subr.bf16.mxu0 0
      %380 = vmatpush2.bf16.msra.mxu0 0
      %381 = vmatprep.subr.bf16.mxu0 0
      %382 = vmatpush2.bf16.msra.mxu0 0
      %383 = vmatprep.subr.bf16.mxu0 0
      %384 = vmatpush2.bf16.msra.mxu0 0
      %385 = vmatprep.subr.bf16.mxu0 0
      %386 = vmatpush2.bf16.msra.mxu0 0
      %387 = vmatprep.subr.bf16.mxu0 0
      %388 = vmatpush2.bf16.msra.mxu0 0
      %389 = vmatprep.subr.bf16.mxu0 0
      %390 = vmatpush2.bf16.msra.mxu0 0
      %391 = vmatprep.mubr.bf16.mxu0 0
      %392 = vmatmul.mubr.bf16.gmra.mxu0 %v312
      %v393 = vpop.f32.mrf.mxu0
      %v394 = vadd.f32 %v216, %v393
      %v395 = vpop.f32.mrf.mxu0
      %v396 = vpop.f32.mrf.mxu0
      %v397 = vadd.f32 %v216, %v396
      %v398 = vpop.f32.mrf.mxu0
      %399 = vmatprep.mubr.bf16.mxu0 0
      %400 = vmatmul.mubr.bf16.gmra.mxu0 %v315
      %v401 = vpop.f32.mrf.mxu0
      %v402 = vadd.f32 %v216, %v401
      %v403 = vpop.f32.mrf.mxu0
      %v404 = vpop.f32.mrf.mxu0
      %v405 = vadd.f32 %v216, %v404
      %v406 = vpop.f32.mrf.mxu0
      %407 = vmatprep.mubr.bf16.mxu0 0
      %408 = vmatmul.mubr.bf16.gmra.mxu0 %v318
      %v409 = vpop.f32.mrf.mxu0
      %v410 = vadd.f32 %v216, %v409
      %v411 = vpop.f32.mrf.mxu0
      %v412 = vpop.f32.mrf.mxu0
      %v413 = vadd.f32 %v216, %v412
      %v414 = vpop.f32.mrf.mxu0
      %415 = vmatprep.mubr.bf16.mxu0 0
      %416 = vmatmul.mubr.bf16.gmra.mxu0 %v321
      %v417 = vpop.f32.mrf.mxu0
      %v418 = vadd.f32 %v216, %v417
      %v419 = vpop.f32.mrf.mxu0
      %v420 = vpop.f32.mrf.mxu0
      %v421 = vadd.f32 %v216, %v420
      %v422 = vpop.f32.mrf.mxu0
      %423 = vmatprep.mubr.bf16.mxu0 0
      %424 = vmatmul.mubr.bf16.gmra.mxu0 %v324
      %v425 = vpop.f32.mrf.mxu0
      %v426 = vadd.f32 %v216, %v425
      %v427 = vpop.f32.mrf.mxu0
      %v428 = vpop.f32.mrf.mxu0
      %v429 = vadd.f32 %v216, %v428
      %v430 = vpop.f32.mrf.mxu0
      %431 = vmatprep.mubr.bf16.mxu0 0
      %432 = vmatmul.mubr.bf16.gmra.mxu0 %v327
      %v433 = vpop.f32.mrf.mxu0
      %v434 = vadd.f32 %v216, %v433
      %v435 = vpop.f32.mrf.mxu0
      %v436 = vpop.f32.mrf.mxu0
      %v437 = vadd.f32 %v216, %v436
      %v438 = vpop.f32.mrf.mxu0
      %439 = vmatprep.mubr.bf16.mxu0 0
      %440 = vmatmul.mubr.bf16.gmra.mxu0 %v330
      %v441 = vpop.f32.mrf.mxu0
      %v442 = vadd.f32 %v216, %v441
      %v443 = vpop.f32.mrf.mxu0
      %v444 = vpop.f32.mrf.mxu0
      %v445 = vadd.f32 %v216, %v444
      %v446 = vpop.f32.mrf.mxu0
      %447 = vmatprep.mubr.bf16.mxu0 0
      %448 = vmatmul.mubr.bf16.gmra.mxu0 %v333
      %v449 = vpop.f32.mrf.mxu0
      %v450 = vadd.f32 %v216, %v449
      %v451 = vpop.f32.mrf.mxu0
      %v452 = vpop.f32.mrf.mxu0
      %v453 = vadd.f32 %v216, %v452
      %v454 = vpop.f32.mrf.mxu0
      %455 = vmatprep.mubr.bf16.mxu0 0
      %456 = vmatmul.mubr.bf16.gmra.mxu0 %v336
      %v457 = vpop.f32.mrf.mxu0
      %v458 = vadd.f32 %v216, %v457
      %v459 = vpop.f32.mrf.mxu0
      %v460 = vpop.f32.mrf.mxu0
      %v461 = vadd.f32 %v216, %v460
      %v462 = vpop.f32.mrf.mxu0
      %463 = vmatprep.mubr.bf16.mxu0 0
      %464 = vmatmul.mubr.bf16.gmra.mxu0 %v339
      %v465 = vpop.f32.mrf.mxu0
      %v466 = vadd.f32 %v216, %v465
      %v467 = vpop.f32.mrf.mxu0
      %v468 = vpop.f32.mrf.mxu0
      %v469 = vadd.f32 %v216, %v468
      %v470 = vpop.f32.mrf.mxu0
      %471 = vmatprep.mubr.bf16.mxu0 0
      %472 = vmatmul.mubr.bf16.gmra.mxu0 %v342
      %v473 = vpop.f32.mrf.mxu0
      %v474 = vadd.f32 %v216, %v473
      %v475 = vpop.f32.mrf.mxu0
      %v476 = vpop.f32.mrf.mxu0
      %v477 = vadd.f32 %v216, %v476
      %v478 = vpop.f32.mrf.mxu0
      %479 = vmatprep.mubr.bf16.mxu0 0
      %480 = vmatmul.mubr.bf16.gmra.mxu0 %v345
      %v481 = vpop.f32.mrf.mxu0
      %v482 = vadd.f32 %v216, %v481
      %v483 = vpop.f32.mrf.mxu0
      %v484 = vpop.f32.mrf.mxu0
      %v485 = vadd.f32 %v216, %v484
      %v486 = vpop.f32.mrf.mxu0
      %487 = vmatprep.mubr.bf16.mxu0 0
      %488 = vmatmul.mubr.bf16.gmra.mxu0 %v348
      %v489 = vpop.f32.mrf.mxu0
      %v490 = vadd.f32 %v216, %v489
      %v491 = vpop.f32.mrf.mxu0
      %v492 = vpop.f32.mrf.mxu0
      %v493 = vadd.f32 %v216, %v492
      %v494 = vpop.f32.mrf.mxu0
      %495 = vmatprep.mubr.bf16.mxu0 0
      %496 = vmatmul.mubr.bf16.gmra.mxu0 %v351
      %v497 = vpop.f32.mrf.mxu0
      %v498 = vadd.f32 %v216, %v497
      %v499 = vpop.f32.mrf.mxu0
      %v500 = vpop.f32.mrf.mxu0
      %v501 = vadd.f32 %v216, %v500
      %v502 = vpop.f32.mrf.mxu0
      %503 = vmatprep.mubr.bf16.mxu0 0
      %504 = vmatmul.mubr.bf16.gmra.mxu0 %v354
      %v505 = vpop.f32.mrf.mxu0
      %v506 = vadd.f32 %v216, %v505
      %v507 = vpop.f32.mrf.mxu0
      %v508 = vpop.f32.mrf.mxu0
      %v509 = vadd.f32 %v216, %v508
      %v510 = vpop.f32.mrf.mxu0
      %511 = vmatprep.mubr.bf16.mxu0 0
      %512 = vmatmul.mubr.bf16.gmra.mxu0 %v357
      %v513 = vpop.f32.mrf.mxu0
      %v514 = vadd.f32 %v216, %v513
      %v515 = vpop.f32.mrf.mxu0
      %v516 = vpop.f32.mrf.mxu0
      %v517 = vadd.f32 %v216, %v516
      %v518 = vpop.f32.mrf.mxu0
      %519 = vdwg.mxu0
      %v520 = vmax.f32 %v394, 0.0
      %v521 = vmax.f32 %v397, 0.0
      %v522 = vmax.f32 %v402, 0.0
      %v523 = vmax.f32 %v405, 0.0
      %v524 = vmax.f32 %v410, 0.0
      %v525 = vmax.f32 %v413, 0.0
      %v526 = vmax.f32 %v418, 0.0
      %v527 = vmax.f32 %v421, 0.0
      %v528 = vmax.f32 %v426, 0.0
      %v529 = vmax.f32 %v429, 0.0
      %v530 = vmax.f32 %v434, 0.0
      %v531 = vmax.f32 %v437, 0.0
      %v532 = vmax.f32 %v442, 0.0
      %v533 = vmax.f32 %v445, 0.0
      %v534 = vmax.f32 %v450, 0.0
      %v535 = vmax.f32 %v453, 0.0
      %v536 = vmax.f32 %v458, 0.0
      %v537 = vmax.f32 %v461, 0.0
      %v538 = vmax.f32 %v466, 0.0
      %v539 = vmax.f32 %v469, 0.0
      %v540 = vmax.f32 %v474, 0.0
      %v541 = vmax.f32 %v477, 0.0
      %v542 = vmax.f32 %v482, 0.0
      %v543 = vmax.f32 %v485, 0.0
      %v544 = vmax.f32 %v490, 0.0
      %v545 = vmax.f32 %v493, 0.0
      %v546 = vmax.f32 %v498, 0.0
      %v547 = vmax.f32 %v501, 0.0
      %v548 = vmax.f32 %v506, 0.0
      %v549 = vmax.f32 %v509, 0.0
      %v550 = vmax.f32 %v514, 0.0
      %v551 = vmax.f32 %v517, 0.0
      %v552 = vpack.c.bf16 %v521, %v520
      %v553 = vpack.c.bf16 %v523, %v522
      %v554 = vpack.c.bf16 %v525, %v524
      %v555 = vpack.c.bf16 %v527, %v526
      %v556 = vpack.c.bf16 %v529, %v528
      %v557 = vpack.c.bf16 %v531, %v530
      %v558 = vpack.c.bf16 %v533, %v532
      %v559 = vpack.c.bf16 %v535, %v534
      %v560 = vpack.c.bf16 %v537, %v536
      %v561 = vpack.c.bf16 %v539, %v538
      %v562 = vpack.c.bf16 %v541, %v540
      %v563 = vpack.c.bf16 %v543, %v542
      %v564 = vpack.c.bf16 %v545, %v544
      %v565 = vpack.c.bf16 %v547, %v546
      %v566 = vpack.c.bf16 %v549, %v548
      %v567 = vpack.c.bf16 %v551, %v550
      %v584 = vunpack.c.l.b16 %v552
      %v585 = vunpack.c.h.b16 %v552
      %v586 = vunpack.c.l.b16 %v553
      %v587 = vunpack.c.h.b16 %v553
      %v588 = vunpack.c.l.b16 %v554
      %v589 = vunpack.c.h.b16 %v554
      %v590 = vunpack.c.l.b16 %v555
      %v591 = vunpack.c.h.b16 %v555
      %v592 = vunpack.c.l.b16 %v556
      %v593 = vunpack.c.h.b16 %v556
      %v594 = vunpack.c.l.b16 %v557
      %v595 = vunpack.c.h.b16 %v557
      %v596 = vunpack.c.l.b16 %v558
      %v597 = vunpack.c.h.b16 %v558
      %v598 = vunpack.c.l.b16 %v559
      %v599 = vunpack.c.h.b16 %v559
      %v600 = vunpack.c.l.b16 %v560
      %v601 = vunpack.c.h.b16 %v560
      %v602 = vunpack.c.l.b16 %v561
      %v603 = vunpack.c.h.b16 %v561
      %v604 = vunpack.c.l.b16 %v562
      %v605 = vunpack.c.h.b16 %v562
      %v606 = vunpack.c.l.b16 %v563
      %v607 = vunpack.c.h.b16 %v563
      %v608 = vunpack.c.l.b16 %v564
      %v609 = vunpack.c.h.b16 %v564
      %v610 = vunpack.c.l.b16 %v565
      %v611 = vunpack.c.h.b16 %v565
      %v612 = vunpack.c.l.b16 %v566
      %v613 = vunpack.c.h.b16 %v566
      %v614 = vunpack.c.l.b16 %v567
      %v615 = vunpack.c.h.b16 %v567
      %v616 = vpack.c.b16 %v584, %v584
      %v617 = vpack.c.b16 %v585, %v585
      %v618 = vpack.c.b16 %v586, %v586
      %v619 = vpack.c.b16 %v587, %v587
      %v620 = vpack.c.b16 %v588, %v588
      %v621 = vpack.c.b16 %v589, %v589
      %v622 = vpack.c.b16 %v590, %v590
      %v623 = vpack.c.b16 %v591, %v591
      %v624 = vpack.c.b16 %v592, %v592
      %v625 = vpack.c.b16 %v593, %v593
      %v626 = vpack.c.b16 %v594, %v594
      %v627 = vpack.c.b16 %v595, %v595
      %v628 = vpack.c.b16 %v596, %v596
      %v629 = vpack.c.b16 %v597, %v597
      %v630 = vpack.c.b16 %v598, %v598
      %v631 = vpack.c.b16 %v599, %v599
      %v632 = vpack.c.b16 %v600, %v600
      %v633 = vpack.c.b16 %v601, %v601
      %v634 = vpack.c.b16 %v602, %v602
      %v635 = vpack.c.b16 %v603, %v603
      %v636 = vpack.c.b16 %v604, %v604
      %v637 = vpack.c.b16 %v605, %v605
      %v638 = vpack.c.b16 %v606, %v606
      %v639 = vpack.c.b16 %v607, %v607
      %v640 = vpack.c.b16 %v608, %v608
      %v641 = vpack.c.b16 %v609, %v609
      %v642 = vpack.c.b16 %v610, %v610
      %v643 = vpack.c.b16 %v611, %v611
      %v644 = vpack.c.b16 %v612, %v612
      %v645 = vpack.c.b16 %v613, %v613
      %v646 = vpack.c.b16 %v614, %v614
      %v647 = vpack.c.b16 %v615, %v615
      %vm680 = vcmask 60416
      %681 = vst.msk [vmem:[%s172] sm:$0xf] %vm680, %v616
      %682 = vst.msk [vmem:[%s172 + $0x4] sm:$0xf] %vm680, %v617
      %683 = vst.msk [vmem:[%s172 + $0x8] sm:$0xf] %vm680, %v618
      %684 = vst.msk [vmem:[%s172 + $0xc] sm:$0xf] %vm680, %v619
      %685 = vst.msk [vmem:[%s172 + $0x10] sm:$0xf] %vm680, %v620
      %686 = vst.msk [vmem:[%s172 + $0x14] sm:$0xf] %vm680, %v621
      %687 = vst.msk [vmem:[%s172 + $0x18] sm:$0xf] %vm680, %v622
      %688 = vst.msk [vmem:[%s172 + $0x1c] sm:$0xf] %vm680, %v623
      %689 = vst.msk [vmem:[%s172 + $0x20] sm:$0xf] %vm680, %v624
      %690 = vst.msk [vmem:[%s172 + $0x24] sm:$0xf] %vm680, %v625
      %691 = vst.msk [vmem:[%s172 + $0x28] sm:$0xf] %vm680, %v626
      %692 = vst.msk [vmem:[%s172 + $0x2c] sm:$0xf] %vm680, %v627
      %693 = vst.msk [vmem:[%s172 + $0x30] sm:$0xf] %vm680, %v628
      %694 = vst.msk [vmem:[%s172 + $0x34] sm:$0xf] %vm680, %v629
      %695 = vst.msk [vmem:[%s172 + $0x38] sm:$0xf] %vm680, %v630
      %696 = vst.msk [vmem:[%s172 + $0x3c] sm:$0xf] %vm680, %v631
      %697 = vst.msk [vmem:[%s172 + $0x40] sm:$0xf] %vm680, %v632
      %698 = vst.msk [vmem:[%s172 + $0x44] sm:$0xf] %vm680, %v633
      %699 = vst.msk [vmem:[%s172 + $0x48] sm:$0xf] %vm680, %v634
      %700 = vst.msk [vmem:[%s172 + $0x4c] sm:$0xf] %vm680, %v635
      %701 = vst.msk [vmem:[%s172 + $0x50] sm:$0xf] %vm680, %v636
      %702 = vst.msk [vmem:[%s172 + $0x54] sm:$0xf] %vm680, %v637
      %703 = vst.msk [vmem:[%s172 + $0x58] sm:$0xf] %vm680, %v638
      %704 = vst.msk [vmem:[%s172 + $0x5c] sm:$0xf] %vm680, %v639
      %705 = vst.msk [vmem:[%s172 + $0x60] sm:$0xf] %vm680, %v640
      %706 = vst.msk [vmem:[%s172 + $0x64] sm:$0xf] %vm680, %v641
      %707 = vst.msk [vmem:[%s172 + $0x68] sm:$0xf] %vm680, %v642
      %708 = vst.msk [vmem:[%s172 + $0x6c] sm:$0xf] %vm680, %v643
      %709 = vst.msk [vmem:[%s172 + $0x70] sm:$0xf] %vm680, %v644
      %710 = vst.msk [vmem:[%s172 + $0x74] sm:$0xf] %vm680, %v645
      %711 = vst.msk [vmem:[%s172 + $0x78] sm:$0xf] %vm680, %v646
      %712 = vst.msk [vmem:[%s172 + $0x7c] sm:$0xf] %vm680, %v647
      %s713 = smul.u32 32, %s14
      %p714 = scmp.lt.s32.totalorder %s713, 63
      %s715 = scalar_select %p714, %s713, 63
      %s716 = smul.addr %s715, 4
      %s717 = scalar_lea.vmem %s3, %s716
      // Predicated region
      $region33: #{tpu_custom_call.1} parent=31 // pred_check
        %p718 = pneg %p100
      $region34: #{tpu_custom_call.1} parent=31 // pred_check_branch
        %720 = sbr.rel (%p718) target = $region36
      $region35: #{tpu_custom_call.1} parent=31 // pred_region
        %s721 = smul.u32 32, %s14
      $region36: #{tpu_custom_call.1} parent=31 // pred_fallthru
        _
    $region32: #{tpu_custom_call.1} parent=5 // pred_fallthru
      _
    %p722 = scmp.le.s32.totalorder 2, %s9
    // Predicated region
    $region37: #{tpu_custom_call.1} parent=5 // pred_check
      %p723 = pneg %p722
    $region38: #{tpu_custom_call.1} parent=5 // pred_check_branch
      %725 = sbr.rel (%p723) target = $region40
    $region39: #{tpu_custom_call.1} parent=5 // pred_region
      %s726 = ssub.s32 %s9, 2
      // Predicated region
      $region41: #{tpu_custom_call.1} parent=39 // pred_check
        %p727 = pneg %p106
      $region42: #{tpu_custom_call.1} parent=39 // pred_check_branch
        %729 = sbr.rel (%p727) target = $region44
      $region43: #{tpu_custom_call.1} parent=39 // pred_region
        %s730 = smul.u32 32, %s15
        %p731 = scmp.lt.s32.totalorder %s730, 63
        %s732 = scalar_select %p731, %s730, 63
        %s733 = smul.addr %s732, 4
        %s734 = scalar_lea.vmem %s3, %s733
      $region44: #{tpu_custom_call.1} parent=39 // pred_fallthru
        _
    $region40: #{tpu_custom_call.1} parent=5 // pred_fallthru
      _
  $region6: #{tpu_custom_call.1} parent=0 // loop_footer
    %s13 = sadd.s32 1, %s9
  $region7: #{tpu_custom_call.1} parent=0 // loop_footer_branch
    %8 = sbr.rel target = $region3
  $region8: #{tpu_custom_call.1} parent=0 // loop_exit
    _

</llo_original>
